<compile_context>
chip_gen: v7x
topology: tpu7x:2x2x1
jax: 0.10.0
libtpu: 0.0.40
codegen_flags: <defaults>
</compile_context>

<pallas_src>
import functools

import jax
import jax.numpy as jnp
from jax.experimental import pallas as pl
from jax.experimental.pallas import tpu as pltpu


HIDDEN = 16
P_DROP = 0.2
N_DROP_LAYERS = 4
DEFAULT_TILE_B = 512   # sized conservatively for v7x's 64 MiB VMEM as well


def _round_up(n, m):
    return ((n + m - 1) // m) * m


def _mlp_kernel(*refs, p, training):
    if training:
        (x_ref, bits_ref,
         w1_ref, wmid_ref, w5_ref, bmid_ref, b5_ref, o_ref) = refs
    else:
        (x_ref,
         w1_ref, wmid_ref, w5_ref, bmid_ref, b5_ref, o_ref) = refs
        bits_ref = None

    scale = jnp.float32(1.0 / (1.0 - p))
    thresh = jnp.uint32(min(int(round(p * float(1 << 32))), (1 << 32) - 1))

    def dense(h, w, b):
        # bf16 inputs -> single-pass MXU; f32 accumulation.
        y = jnp.dot(h.astype(jnp.bfloat16), w.astype(jnp.bfloat16),
                    preferred_element_type=jnp.float32)
        return y + b

    def drop(h, layer_idx):
        if not training:
            return h
        keep = bits_ref[layer_idx] >= thresh          # (TILE_B, HIDDEN) bool
        return jnp.where(keep, h * scale, jnp.float32(0.0))

    x = x_ref[...].astype(jnp.float32)                # (TILE_B, n_input)
    bmid = bmid_ref[...]                              # (4, HIDDEN) f32
    wmid = wmid_ref[...]                              # (3, HIDDEN, HIDDEN) f32

    h = drop(jnp.maximum(dense(x, w1_ref[...], bmid[0]), 0.0), 0)
    for l in range(3):
        h = drop(jnp.maximum(dense(h, wmid[l], bmid[l + 1]), 0.0), l + 1)

    o_ref[...] = dense(h, w5_ref[...], b5_ref[...]).astype(o_ref.dtype)


def mlp_net5_drop_apply(params, x, rng_key=None, *, p=P_DROP, training=True,
                        tile_b=DEFAULT_TILE_B):
    """MLPNet5Drop forward pass as one batch-tiled Pallas TPU kernel.

    params: dict with w1..w5 as (in, out) and b1..b5 as (1, out) float32 arrays.
    x:      (batch, n_input) float32.
    rng_key: jax PRNG key, required when training=True (dropout mask).
    """
    batch, n_input = x.shape
    n_classes = params["w5"].shape[1]

    tb = min(tile_b, _round_up(batch, 8))
    padded = _round_up(batch, tb)
    if padded != batch:
        x = jnp.pad(x, ((0, padded - batch), (0, 0)))
    grid = (padded // tb,)

    # Packed weight/bias slabs (fewer operands -> fewer DMA descriptors).
    wmid = jnp.stack([params["w2"], params["w3"], params["w4"]])            # (3,16,16)
    bmid = jnp.concatenate([params["b1"], params["b2"],
                            params["b3"], params["b4"]], axis=0)            # (4,16)

    x_spec = pl.BlockSpec((tb, n_input), lambda i: (i, 0))
    out_spec = pl.BlockSpec((tb, n_classes), lambda i: (i, 0))
    w1_spec = pl.BlockSpec(params["w1"].shape, lambda i: (0, 0))
    wmid_spec = pl.BlockSpec(wmid.shape, lambda i: (0, 0, 0))
    w5_spec = pl.BlockSpec(params["w5"].shape, lambda i: (0, 0))
    bmid_spec = pl.BlockSpec(bmid.shape, lambda i: (0, 0))
    b5_spec = pl.BlockSpec(params["b5"].shape, lambda i: (0, 0))

    operands = [x]
    in_specs = [x_spec]
    if training:
        if rng_key is None:
            raise ValueError("rng_key is required when training=True")
        # One PRNG draw for all 4 dropout layers; tiled along batch with x.
        bits = jax.random.bits(rng_key, (N_DROP_LAYERS, padded, HIDDEN),
                               dtype=jnp.uint32)
        operands.append(bits)
        in_specs.append(pl.BlockSpec((N_DROP_LAYERS, tb, HIDDEN),
                                     lambda i: (0, i, 0)))
    operands += [params["w1"], wmid, params["w5"], bmid, params["b5"]]
    in_specs += [w1_spec, wmid_spec, w5_spec, bmid_spec, b5_spec]

    kernel = functools.partial(_mlp_kernel, p=p, training=training)

    out = pl.pallas_call(
        kernel,
        out_shape=jax.ShapeDtypeStruct((padded, n_classes), jnp.float32),
        grid=grid,
        in_specs=in_specs,
        out_specs=out_spec,
        compiler_params=pltpu.CompilerParams(
            dimension_semantics=("parallel",)),
    )(*operands)

    return out[:batch]


def init_params(key, n_input, n_classes):
    """Deterministic init mimicking nn.Linear's U(-1/sqrt(fan_in), 1/sqrt(fan_in))."""
    dims = [(n_input, HIDDEN), (HIDDEN, HIDDEN), (HIDDEN, HIDDEN),
            (HIDDEN, HIDDEN), (HIDDEN, n_classes)]
    params = {}
    for i, (fan_in, fan_out) in enumerate(dims, start=1):
        key, kw, kb = jax.random.split(key, 3)
        bound = 1.0 / (fan_in ** 0.5)
        params[f"w{i}"] = jax.random.uniform(
            kw, (fan_in, fan_out), jnp.float32, -bound, bound)
        params[f"b{i}"] = jax.random.uniform(
            kb, (1, fan_out), jnp.float32, -bound, bound)
    return params


if __name__ == "__main__":
    key = jax.random.PRNGKey(0)
    k_param, k_x, k_drop = jax.random.split(key, 3)

    batch, n_input, n_classes = 8, 32, 4
    params = init_params(k_param, n_input, n_classes)
    x = jax.random.normal(k_x, (batch, n_input), jnp.float32)

    # training=True matches the torch module's default train() mode (dropout on)
    out_train = mlp_net5_drop_apply(params, x, rng_key=k_drop, training=True)
    out_eval = mlp_net5_drop_apply(params, x, training=False)
    jax.block_until_ready(out_train)
    jax.block_until_ready(out_eval)

    # Plain-JAX reference in eval mode, mirroring the kernel's bf16 MXU inputs.
    def ref_dense(h, w, b):
        return jnp.dot(h.astype(jnp.bfloat16), w.astype(jnp.bfloat16),
                       preferred_element_type=jnp.float32) + b

    h = x
    for i in range(1, 5):
        h = jnp.maximum(ref_dense(h, params[f"w{i}"], params[f"b{i}"]), 0.0)
    ref = ref_dense(h, params["w5"], params["b5"])

    assert out_train.shape == (batch, n_classes)
    assert bool(jnp.all(jnp.isfinite(out_train)))
    assert out_eval.shape == (batch, n_classes)
    assert jnp.allclose(out_eval, ref, atol=1e-3, rtol=1e-3)

    print("KERNEL_OK")
</pallas_src>

<mosaic_0001>
module attributes {stable_mosaic.version = 11 : i64} {
  func.func @_mlp_kernel(%arg0: i32, %arg1: memref<8x32xf32, #tpu.memory_space<vmem>>, %arg2: memref<4x8x16xi32, #tpu.memory_space<vmem>>, %arg3: memref<32x16xf32, #tpu.memory_space<vmem>>, %arg4: memref<3x16x16xf32, #tpu.memory_space<vmem>>, %arg5: memref<16x4xf32, #tpu.memory_space<vmem>>, %arg6: memref<4x16xf32, #tpu.memory_space<vmem>>, %arg7: memref<1x4xf32, #tpu.memory_space<vmem>>, %arg8: memref<8x4xf32, #tpu.memory_space<vmem>>) attributes {dimension_semantics = [#tpu.dimension_semantics<parallel>], iteration_bounds = array<i64: 1>, scalar_prefetch = 0 : i64, scratch_operands = 0 : i64, tpu.core_type = #tpu.core_type<tc>, window_params = [{transform_indices = @transform_0, window_bounds = array<i64: 8, 32>}, {transform_indices = @transform_1, window_bounds = array<i64: 4, 8, 16>}, {pipeline_mode = #tpu.pipeline_mode<synchronous>, transform_indices = @transform_2, window_bounds = array<i64: 32, 16>}, {pipeline_mode = #tpu.pipeline_mode<synchronous>, transform_indices = @transform_3, window_bounds = array<i64: 3, 16, 16>}, {pipeline_mode = #tpu.pipeline_mode<synchronous>, transform_indices = @transform_4, window_bounds = array<i64: 16, 4>}, {pipeline_mode = #tpu.pipeline_mode<synchronous>, transform_indices = @transform_5, window_bounds = array<i64: 4, 16>}, {pipeline_mode = #tpu.pipeline_mode<synchronous>, transform_indices = @transform_6, window_bounds = array<i64: 1, 4>}, {transform_indices = @transform_7, window_bounds = array<i64: 8, 4>}]} {
    %c0 = arith.constant 0 : index
    %c0_0 = arith.constant 0 : index
    %0 = vector.load %arg1[%c0, %c0_0] : memref<8x32xf32, #tpu.memory_space<vmem>>, vector<8x32xf32>
    %c0_1 = arith.constant 0 : index
    %c0_2 = arith.constant 0 : index
    %1 = vector.load %arg6[%c0_1, %c0_2] : memref<4x16xf32, #tpu.memory_space<vmem>>, vector<4x16xf32>
    %c0_3 = arith.constant 0 : index
    %c0_4 = arith.constant 0 : index
    %c0_5 = arith.constant 0 : index
    %2 = vector.load %arg4[%c0_3, %c0_4, %c0_5] : memref<3x16x16xf32, #tpu.memory_space<vmem>>, vector<3x16x16xf32>
    %c0_6 = arith.constant 0 : index
    %c0_7 = arith.constant 0 : index
    %3 = vector.load %arg3[%c0_6, %c0_7] : memref<32x16xf32, #tpu.memory_space<vmem>>, vector<32x16xf32>
    %4 = vector.extract_strided_slice %1 {offsets = [0, 0], sizes = [1, 16], strides = [1, 1]} : vector<4x16xf32> to vector<1x16xf32>
    %5 = vector.shape_cast %4 : vector<1x16xf32> to vector<16xf32>
    %6 = arith.truncf %0 : vector<8x32xf32> to vector<8x32xbf16>
    %7 = arith.truncf %3 : vector<32x16xf32> to vector<32x16xbf16>
    %cst = arith.constant dense<0.000000e+00> : vector<8x16xf32>
    %8 = tpu.matmul %6, %7, %cst {dimension_numbers = #tpu.dot_dimension_numbers<[1], [0], [0], [1], [0, 0, 1, 1], [], []>} : vector<8x32xbf16>, vector<32x16xbf16>, vector<8x16xf32> -> vector<8x16xf32>
    %9 = vector.shape_cast %5 : vector<16xf32> to vector<1x16xf32>
    %10 = vector.broadcast %9 : vector<1x16xf32> to vector<8x16xf32>
    %11 = arith.addf %8, %10 : vector<8x16xf32>
    %cst_8 = arith.constant 0.000000e+00 : f32
    %12 = vector.broadcast %cst_8 : f32 to vector<8x16xf32>
    %13 = arith.maximumf %11, %12 : vector<8x16xf32>
    %c0_9 = arith.constant 0 : index
    %c0_10 = arith.constant 0 : index
    %c0_11 = arith.constant 0 : index
    %14 = vector.load %arg2[%c0_9, %c0_10, %c0_11] : memref<4x8x16xi32, #tpu.memory_space<vmem>>, vector<1x8x16xi32>
    %15 = vector.shape_cast %14 : vector<1x8x16xi32> to vector<8x16xi32>
    %c858993459_i32 = arith.constant 858993459 : i32
    %16 = vector.broadcast %c858993459_i32 : i32 to vector<8x16xi32>
    %17 = arith.cmpi uge, %15, %16 : vector<8x16xi32>
    %cst_12 = arith.constant 1.250000e+00 : f32
    %18 = vector.broadcast %cst_12 : f32 to vector<8x16xf32>
    %19 = arith.mulf %13, %18 : vector<8x16xf32>
    %cst_13 = arith.constant 0.000000e+00 : f32
    %20 = vector.broadcast %cst_13 : f32 to vector<8x16xf32>
    %21 = arith.select %17, %19, %20 : vector<8x16xi1>, vector<8x16xf32>
    %22 = vector.extract_strided_slice %2 {offsets = [0, 0, 0], sizes = [1, 16, 16], strides = [1, 1, 1]} : vector<3x16x16xf32> to vector<1x16x16xf32>
    %23 = vector.shape_cast %22 : vector<1x16x16xf32> to vector<16x16xf32>
    %24 = vector.extract_strided_slice %1 {offsets = [1, 0], sizes = [1, 16], strides = [1, 1]} : vector<4x16xf32> to vector<1x16xf32>
    %25 = vector.shape_cast %24 : vector<1x16xf32> to vector<16xf32>
    %26 = arith.truncf %21 : vector<8x16xf32> to vector<8x16xbf16>
    %27 = arith.truncf %23 : vector<16x16xf32> to vector<16x16xbf16>
    %cst_14 = arith.constant dense<0.000000e+00> : vector<8x16xf32>
    %28 = tpu.matmul %26, %27, %cst_14 {dimension_numbers = #tpu.dot_dimension_numbers<[1], [0], [0], [1], [0, 0, 1, 1], [], []>} : vector<8x16xbf16>, vector<16x16xbf16>, vector<8x16xf32> -> vector<8x16xf32>
    %29 = vector.shape_cast %25 : vector<16xf32> to vector<1x16xf32>
    %30 = vector.broadcast %29 : vector<1x16xf32> to vector<8x16xf32>
    %31 = arith.addf %28, %30 : vector<8x16xf32>
    %cst_15 = arith.constant 0.000000e+00 : f32
    %32 = vector.broadcast %cst_15 : f32 to vector<8x16xf32>
    %33 = arith.maximumf %31, %32 : vector<8x16xf32>
    %c1 = arith.constant 1 : index
    %c0_16 = arith.constant 0 : index
    %c0_17 = arith.constant 0 : index
    %34 = vector.load %arg2[%c1, %c0_16, %c0_17] : memref<4x8x16xi32, #tpu.memory_space<vmem>>, vector<1x8x16xi32>
    %35 = vector.shape_cast %34 : vector<1x8x16xi32> to vector<8x16xi32>
    %c858993459_i32_18 = arith.constant 858993459 : i32
    %36 = vector.broadcast %c858993459_i32_18 : i32 to vector<8x16xi32>
    %37 = arith.cmpi uge, %35, %36 : vector<8x16xi32>
    %cst_19 = arith.constant 1.250000e+00 : f32
    %38 = vector.broadcast %cst_19 : f32 to vector<8x16xf32>
    %39 = arith.mulf %33, %38 : vector<8x16xf32>
    %cst_20 = arith.constant 0.000000e+00 : f32
    %40 = vector.broadcast %cst_20 : f32 to vector<8x16xf32>
    %41 = arith.select %37, %39, %40 : vector<8x16xi1>, vector<8x16xf32>
    %42 = vector.extract_strided_slice %2 {offsets = [1, 0, 0], sizes = [1, 16, 16], strides = [1, 1, 1]} : vector<3x16x16xf32> to vector<1x16x16xf32>
    %43 = vector.shape_cast %42 : vector<1x16x16xf32> to vector<16x16xf32>
    %44 = vector.extract_strided_slice %1 {offsets = [2, 0], sizes = [1, 16], strides = [1, 1]} : vector<4x16xf32> to vector<1x16xf32>
    %45 = vector.shape_cast %44 : vector<1x16xf32> to vector<16xf32>
    %46 = arith.truncf %41 : vector<8x16xf32> to vector<8x16xbf16>
    %47 = arith.truncf %43 : vector<16x16xf32> to vector<16x16xbf16>
    %cst_21 = arith.constant dense<0.000000e+00> : vector<8x16xf32>
    %48 = tpu.matmul %46, %47, %cst_21 {dimension_numbers = #tpu.dot_dimension_numbers<[1], [0], [0], [1], [0, 0, 1, 1], [], []>} : vector<8x16xbf16>, vector<16x16xbf16>, vector<8x16xf32> -> vector<8x16xf32>
    %49 = vector.shape_cast %45 : vector<16xf32> to vector<1x16xf32>
    %50 = vector.broadcast %49 : vector<1x16xf32> to vector<8x16xf32>
    %51 = arith.addf %48, %50 : vector<8x16xf32>
    %cst_22 = arith.constant 0.000000e+00 : f32
    %52 = vector.broadcast %cst_22 : f32 to vector<8x16xf32>
    %53 = arith.maximumf %51, %52 : vector<8x16xf32>
    %c2 = arith.constant 2 : index
    %c0_23 = arith.constant 0 : index
    %c0_24 = arith.constant 0 : index
    %54 = vector.load %arg2[%c2, %c0_23, %c0_24] : memref<4x8x16xi32, #tpu.memory_space<vmem>>, vector<1x8x16xi32>
    %55 = vector.shape_cast %54 : vector<1x8x16xi32> to vector<8x16xi32>
    %c858993459_i32_25 = arith.constant 858993459 : i32
    %56 = vector.broadcast %c858993459_i32_25 : i32 to vector<8x16xi32>
    %57 = arith.cmpi uge, %55, %56 : vector<8x16xi32>
    %cst_26 = arith.constant 1.250000e+00 : f32
    %58 = vector.broadcast %cst_26 : f32 to vector<8x16xf32>
    %59 = arith.mulf %53, %58 : vector<8x16xf32>
    %cst_27 = arith.constant 0.000000e+00 : f32
    %60 = vector.broadcast %cst_27 : f32 to vector<8x16xf32>
    %61 = arith.select %57, %59, %60 : vector<8x16xi1>, vector<8x16xf32>
    %62 = vector.extract_strided_slice %2 {offsets = [2, 0, 0], sizes = [1, 16, 16], strides = [1, 1, 1]} : vector<3x16x16xf32> to vector<1x16x16xf32>
    %63 = vector.shape_cast %62 : vector<1x16x16xf32> to vector<16x16xf32>
    %64 = vector.extract_strided_slice %1 {offsets = [3, 0], sizes = [1, 16], strides = [1, 1]} : vector<4x16xf32> to vector<1x16xf32>
    %65 = vector.shape_cast %64 : vector<1x16xf32> to vector<16xf32>
    %66 = arith.truncf %61 : vector<8x16xf32> to vector<8x16xbf16>
    %67 = arith.truncf %63 : vector<16x16xf32> to vector<16x16xbf16>
    %cst_28 = arith.constant dense<0.000000e+00> : vector<8x16xf32>
    %68 = tpu.matmul %66, %67, %cst_28 {dimension_numbers = #tpu.dot_dimension_numbers<[1], [0], [0], [1], [0, 0, 1, 1], [], []>} : vector<8x16xbf16>, vector<16x16xbf16>, vector<8x16xf32> -> vector<8x16xf32>
    %69 = vector.shape_cast %65 : vector<16xf32> to vector<1x16xf32>
    %70 = vector.broadcast %69 : vector<1x16xf32> to vector<8x16xf32>
    %71 = arith.addf %68, %70 : vector<8x16xf32>
    %cst_29 = arith.constant 0.000000e+00 : f32
    %72 = vector.broadcast %cst_29 : f32 to vector<8x16xf32>
    %73 = arith.maximumf %71, %72 : vector<8x16xf32>
    %c3 = arith.constant 3 : index
    %c0_30 = arith.constant 0 : index
    %c0_31 = arith.constant 0 : index
    %74 = vector.load %arg2[%c3, %c0_30, %c0_31] : memref<4x8x16xi32, #tpu.memory_space<vmem>>, vector<1x8x16xi32>
    %75 = vector.shape_cast %74 : vector<1x8x16xi32> to vector<8x16xi32>
    %c858993459_i32_32 = arith.constant 858993459 : i32
    %76 = vector.broadcast %c858993459_i32_32 : i32 to vector<8x16xi32>
    %77 = arith.cmpi uge, %75, %76 : vector<8x16xi32>
    %cst_33 = arith.constant 1.250000e+00 : f32
    %78 = vector.broadcast %cst_33 : f32 to vector<8x16xf32>
    %79 = arith.mulf %73, %78 : vector<8x16xf32>
    %cst_34 = arith.constant 0.000000e+00 : f32
    %80 = vector.broadcast %cst_34 : f32 to vector<8x16xf32>
    %81 = arith.select %77, %79, %80 : vector<8x16xi1>, vector<8x16xf32>
    %c0_35 = arith.constant 0 : index
    %c0_36 = arith.constant 0 : index
    %82 = vector.load %arg5[%c0_35, %c0_36] : memref<16x4xf32, #tpu.memory_space<vmem>>, vector<16x4xf32>
    %c0_37 = arith.constant 0 : index
    %c0_38 = arith.constant 0 : index
    %83 = vector.load %arg7[%c0_37, %c0_38] : memref<1x4xf32, #tpu.memory_space<vmem>>, vector<1x4xf32>
    %84 = arith.truncf %81 : vector<8x16xf32> to vector<8x16xbf16>
    %85 = arith.truncf %82 : vector<16x4xf32> to vector<16x4xbf16>
    %cst_39 = arith.constant dense<0.000000e+00> : vector<8x4xf32>
    %86 = tpu.matmul %84, %85, %cst_39 {dimension_numbers = #tpu.dot_dimension_numbers<[1], [0], [0], [1], [0, 0, 1, 1], [], []>} : vector<8x16xbf16>, vector<16x4xbf16>, vector<8x4xf32> -> vector<8x4xf32>
    %87 = vector.broadcast %83 : vector<1x4xf32> to vector<8x4xf32>
    %88 = arith.addf %86, %87 : vector<8x4xf32>
    %c0_40 = arith.constant 0 : index
    %c0_41 = arith.constant 0 : index
    %89 = vector.load %arg8[%c0_40, %c0_41] : memref<8x4xf32, #tpu.memory_space<vmem>>, vector<8x4xf32>
    tpu.vector_store %arg8[%c0_40, %c0_41], %88 {strides = array<i32>} : memref<8x4xf32, #tpu.memory_space<vmem>>, vector<8x4xf32>,
    return
  }
  func.func @transform_0(%arg0: i32) -> (i32, i32) {
    %c0_i32 = arith.constant 0 : i32
    %c0_i32_0 = arith.constant 0 : i32
    return %arg0, %c0_i32 : i32, i32
  }
  func.func @transform_1(%arg0: i32) -> (i32, i32, i32) {
    %c0_i32 = arith.constant 0 : i32
    %c0_i32_0 = arith.constant 0 : i32
    %c0_i32_1 = arith.constant 0 : i32
    return %c0_i32, %arg0, %c0_i32_0 : i32, i32, i32
  }
  func.func @transform_2(%arg0: i32) -> (i32, i32) {
    %c0_i32 = arith.constant 0 : i32
    %c0_i32_0 = arith.constant 0 : i32
    %c0_i32_1 = arith.constant 0 : i32
    return %c0_i32, %c0_i32_0 : i32, i32
  }
  func.func @transform_3(%arg0: i32) -> (i32, i32, i32) {
    %c0_i32 = arith.constant 0 : i32
    %c0_i32_0 = arith.constant 0 : i32
    %c0_i32_1 = arith.constant 0 : i32
    %c0_i32_2 = arith.constant 0 : i32
    return %c0_i32, %c0_i32_0, %c0_i32_1 : i32, i32, i32
  }
  func.func @transform_4(%arg0: i32) -> (i32, i32) {
    %c0_i32 = arith.constant 0 : i32
    %c0_i32_0 = arith.constant 0 : i32
    %c0_i32_1 = arith.constant 0 : i32
    return %c0_i32, %c0_i32_0 : i32, i32
  }
  func.func @transform_5(%arg0: i32) -> (i32, i32) {
    %c0_i32 = arith.constant 0 : i32
    %c0_i32_0 = arith.constant 0 : i32
    %c0_i32_1 = arith.constant 0 : i32
    return %c0_i32, %c0_i32_0 : i32, i32
  }
  func.func @transform_6(%arg0: i32) -> (i32, i32) {
    %c0_i32 = arith.constant 0 : i32
    %c0_i32_0 = arith.constant 0 : i32
    %c0_i32_1 = arith.constant 0 : i32
    return %c0_i32, %c0_i32_0 : i32, i32
  }
  func.func @transform_7(%arg0: i32) -> (i32, i32) {
    %c0_i32 = arith.constant 0 : i32
    %c0_i32_0 = arith.constant 0 : i32
    return %arg0, %c0_i32 : i32, i32
  }
}

</mosaic_0001>

<llo_original>
// kernel: tpu_custom_call.1
$region0: #{tpu_custom_call.1}
  #allocation0 [shape = 'u32[]', space=smem, size = 0x4, offset = 0x4, fixed_abs, tag = 'smem constant byte address 0x4 - core index']
  #allocation1 [shape = 'u32[144,128]{1,0:T(1,128)}', space=vmem, size = 0x12000, scoped, tag = 'internal scratch']
  %s0 = inlined_call_operand.vmem [shape: f32[8,32], index: 0, kind: input, shape index: {}]
  %s1 = inlined_call_operand.hbm [shape: u32[4,8,16], index: 1, kind: input, shape index: {}]
  %s2 = inlined_call_operand.vmem [shape: f32[32,16], index: 2, kind: input, shape index: {}]
  %s3 = inlined_call_operand.vmem [shape: f32[3,16,16], index: 3, kind: input, shape index: {}]
  %s4 = inlined_call_operand.vmem [shape: f32[16,4], index: 4, kind: input, shape index: {}]
  %s5 = inlined_call_operand.vmem [shape: f32[4,16], index: 5, kind: input, shape index: {}]
  %s6 = inlined_call_operand.vmem [shape: f32[1,4], index: 6, kind: input, shape index: {}]
  %s7 = inlined_call_operand.vmem [shape: f32[8,4], index: 7, kind: output, shape index: {}]
  %s8 = sld [smem:[#allocation0]]
  $region42: #{tpu_custom_call.1} parent=0
    _
  %s10 = ssub.s32 1, %s8
  %s11 = scalar_select 0, %s10, %s8
  $region1: #{tpu_custom_call.1} parent=0
    #allocation2 [shape = 'u8[16384]{0}', space=vmem, size = 0x4000, scoped, tag = 'input window, operand 1, single buffered']
    #allocation3 [shape = 's32[1]{0}', space=sflag, size = 0x4, scoped, tag = 'scoped memory for tpu_custom_call.1']
    %12 = vsyncpa [#allocation3], 0
    // Predicated region
    $region2: #{tpu_custom_call.1} parent=1 // pred_check
      _
    $region3: #{tpu_custom_call.1} parent=1 // pred_check_branch
      %14 = sbr.rel (0) target = $region5
    $region4: #{tpu_custom_call.1} parent=1 // pred_region
      _
    $region5: #{tpu_custom_call.1} parent=1 // pred_fallthru
      _
    // Predicated region
    $region6: #{tpu_custom_call.1} parent=1 // pred_check
      _
    $region7: #{tpu_custom_call.1} parent=1 // pred_check_branch
      %16 = sbr.rel (0) target = $region9
    $region8: #{tpu_custom_call.1} parent=1 // pred_region
      %s18 = ssub.s32 512, 512
      %19 = vsyncadd [#allocation3], %s18
      %s20 = sshll.u32 [#allocation2], 4
      %s21 = int_to_ptr.vmem [resolvable:$true] %s20
      %26 = dma.hbm_to_vmem [thread:$0]  %s1, 512, %s21, [#allocation3], 128, 128, 8
    $region9: #{tpu_custom_call.1} parent=1 // pred_fallthru
      _
    // Predicated region
    $region10: #{tpu_custom_call.1} parent=1 // pred_check
      _
    $region11: #{tpu_custom_call.1} parent=1 // pred_check_branch
      %28 = sbr.rel (0) target = $region13
    $region12: #{tpu_custom_call.1} parent=1 // pred_region
      _
    $region13: #{tpu_custom_call.1} parent=1 // pred_fallthru
      _
    // Predicated region
    $region14: #{tpu_custom_call.1} parent=1 // pred_check
      _
    $region15: #{tpu_custom_call.1} parent=1 // pred_check_branch
      %30 = sbr.rel (0) target = $region17
    $region16: #{tpu_custom_call.1} parent=1 // pred_region
      _
    $region17: #{tpu_custom_call.1} parent=1 // pred_fallthru
      _
    // Predicated region
    $region18: #{tpu_custom_call.1} parent=1 // pred_check
      _
    $region19: #{tpu_custom_call.1} parent=1 // pred_check_branch
      %32 = sbr.rel (0) target = $region21
    $region20: #{tpu_custom_call.1} parent=1 // pred_region
      _
    $region21: #{tpu_custom_call.1} parent=1 // pred_fallthru
      _
    // Predicated region
    $region22: #{tpu_custom_call.1} parent=1 // pred_check
      _
    $region23: #{tpu_custom_call.1} parent=1 // pred_check_branch
      %34 = sbr.rel (0) target = $region25
    $region24: #{tpu_custom_call.1} parent=1 // pred_region
      _
    $region25: #{tpu_custom_call.1} parent=1 // pred_fallthru
      _
    // Predicated region
    $region26: #{tpu_custom_call.1} parent=1 // pred_check
      _
    $region27: #{tpu_custom_call.1} parent=1 // pred_check_branch
      %36 = sbr.rel (0) target = $region29
    $region28: #{tpu_custom_call.1} parent=1 // pred_region
      _
    $region29: #{tpu_custom_call.1} parent=1 // pred_fallthru
      _
    // Predicated region
    $region30: #{tpu_custom_call.1} parent=1 // pred_check
      _
    $region31: #{tpu_custom_call.1} parent=1 // pred_check_branch
      %38 = sbr.rel (0) target = $region33
    $region32: #{tpu_custom_call.1} parent=1 // pred_region
      %39 = dma.done [#allocation3], 512
    $region33: #{tpu_custom_call.1} parent=1 // pred_fallthru
      _
    %v41 = vld [vmem:[%s0] sm:$0xff]
    %v42 = vld [vmem:[%s5] sm:$0xf]
    %v43 = vld [vmem:[%s3] sm:$0xff]
    %v44 = vld [vmem:[%s3 + $0x8] sm:$0xff]
    %v45 = vld [vmem:[%s3 + $0x10] sm:$0xff]
    %v46 = vld [vmem:[%s3 + $0x18] sm:$0xff]
    %v47 = vld [vmem:[%s3 + $0x20] sm:$0xff]
    %v48 = vld [vmem:[%s3 + $0x28] sm:$0xff]
    %v49 = vld [vmem:[%s2] sm:$0xff]
    %v50 = vld [vmem:[%s2 + $0x8] sm:$0xff]
    %v51 = vld [vmem:[%s2 + $0x10] sm:$0xff]
    %v52 = vld [vmem:[%s2 + $0x18] sm:$0xff]
    %v53 = vpack.c.bf16 %v41, %v41
    %v54 = vpack.c.bf16 %v50, %v49
    %v55 = vpack.c.bf16 %v52, %v51
    %v56 = vlaneseq
    %v57 = vshrl.u32 %v56, 7
    %v58 = vsub.s32 0, %v57
    %v59 = vrot.slane %v42, %v58
    %vm60 = vcmask 261120
    %v62 = vsel %vm60, %v53, 0
    %64 = vmatprep.subr.bf16.mxu0 0
    %65 = vmatpush1.bf16.msra.mxu0 %v54
    %66 = vmatprep.subr.bf16.mxu0 0
    %67 = vmatpush1.bf16.msra.mxu0 %v55
    %68 = vmatprep.subr.bf16.mxu0 0
    %69 = vmatpush1.bf16.msra.mxu0 0
    %70 = vmatprep.subr.bf16.mxu0 0
    %71 = vmatpush1.bf16.msra.mxu0 0
    %72 = vmatprep.subr.bf16.mxu0 0
    %73 = vmatpush1.bf16.msra.mxu0 0
    %74 = vmatprep.subr.bf16.mxu0 0
    %75 = vmatpush1.bf16.msra.mxu0 0
    %76 = vmatprep.subr.bf16.mxu0 0
    %77 = vmatpush1.bf16.msra.mxu0 0
    %78 = vmatprep.subr.bf16.mxu0 0
    %79 = vmatpush1.bf16.msra.mxu0 0
    %80 = vmatprep.subr.bf16.mxu0 0
    %81 = vmatpush1.bf16.msra.mxu0 0
    %82 = vmatprep.subr.bf16.mxu0 0
    %83 = vmatpush1.bf16.msra.mxu0 0
    %84 = vmatprep.subr.bf16.mxu0 0
    %85 = vmatpush1.bf16.msra.mxu0 0
    %86 = vmatprep.subr.bf16.mxu0 0
    %87 = vmatpush1.bf16.msra.mxu0 0
    %88 = vmatprep.subr.bf16.mxu0 0
    %89 = vmatpush1.bf16.msra.mxu0 0
    %90 = vmatprep.subr.bf16.mxu0 0
    %91 = vmatpush1.bf16.msra.mxu0 0
    %92 = vmatprep.subr.bf16.mxu0 0
    %93 = vmatpush1.bf16.msra.mxu0 0
    %94 = vmatprep.subr.bf16.mxu0 0
    %95 = vmatpush1.bf16.msra.mxu0 0
    %96 = vmatprep.mubr.bf16.mxu0 0
    %97 = vmatmul.mubr.bf16.gmra.mrb[0].mxu0 %v62
    %v98 = vpop.f32.mrb[0].mxu0
    %v99 = vadd.f32 %v59, %v98
    %v100 = vpop.f32.mrb[0].mxu0
    %v101 = vpop.f32.mrb[0].mxu0
    %v102 = vpop.f32.mrb[0].mxu0
    %103 = vdwg.mxu0
    %v104 = vmax.f32 %v99, 0.0
    %v105 = vld [vmem:[#allocation2] sm:$0xff]
    %vm106 = vcmp.ge.u32.totalorder %v105, 858993459
    %v107 = vmul.f32 %v104, 1.25
    %v108 = vsel %vm106, %v107, 0.0
    %v109 = vpack.c.bf16 %v108, %v108
    %v110 = vpack.c.bf16 %v44, %v43
    %v111 = vlaneseq
    %v112 = vshrl.u32 %v111, 7
    %v113 = vsub.s32 1, %v112
    %v114 = vrot.slane %v42, %v113
    %vm115 = vcmask 130048
    %v117 = vsel %vm115, %v109, 0
    %119 = vmatprep.subr.bf16.mxu0 0
    %120 = vmatpush1.bf16.msra.mxu0 %v110
    %121 = vmatprep.subr.bf16.mxu0 0
    %122 = vmatpush1.bf16.msra.mxu0 0
    %123 = vmatprep.subr.bf16.mxu0 0
    %124 = vmatpush1.bf16.msra.mxu0 0
    %125 = vmatprep.subr.bf16.mxu0 0
    %126 = vmatpush1.bf16.msra.mxu0 0
    %127 = vmatprep.subr.bf16.mxu0 0
    %128 = vmatpush1.bf16.msra.mxu0 0
    %129 = vmatprep.subr.bf16.mxu0 0
    %130 = vmatpush1.bf16.msra.mxu0 0
    %131 = vmatprep.subr.bf16.mxu0 0
    %132 = vmatpush1.bf16.msra.mxu0 0
    %133 = vmatprep.subr.bf16.mxu0 0
    %134 = vmatpush1.bf16.msra.mxu0 0
    %135 = vmatprep.subr.bf16.mxu0 0
    %136 = vmatpush1.bf16.msra.mxu0 0
    %137 = vmatprep.subr.bf16.mxu0 0
    %138 = vmatpush1.bf16.msra.mxu0 0
    %139 = vmatprep.subr.bf16.mxu0 0
    %140 = vmatpush1.bf16.msra.mxu0 0
    %141 = vmatprep.subr.bf16.mxu0 0
    %142 = vmatpush1.bf16.msra.mxu0 0
    %143 = vmatprep.subr.bf16.mxu0 0
    %144 = vmatpush1.bf16.msra.mxu0 0
    %145 = vmatprep.subr.bf16.mxu0 0
    %146 = vmatpush1.bf16.msra.mxu0 0
    %147 = vmatprep.subr.bf16.mxu0 0
    %148 = vmatpush1.bf16.msra.mxu0 0
    %149 = vmatprep.subr.bf16.mxu0 0
    %150 = vmatpush1.bf16.msra.mxu0 0
    %151 = vmatprep.mubr.bf16.mxu0 0
    %152 = vmatmul.mubr.bf16.gmra.mrb[0].mxu0 %v117
    %v153 = vpop.f32.mrb[0].mxu0
    %v154 = vadd.f32 %v114, %v153
    %v155 = vpop.f32.mrb[0].mxu0
    %v156 = vpop.f32.mrb[0].mxu0
    %v157 = vpop.f32.mrb[0].mxu0
    %158 = vdwg.mxu0
    %v159 = vmax.f32 %v154, 0.0
    %s160 = scalar_lea.vmem [#allocation2], 8
    %v161 = vld [vmem:[%s160] sm:$0xff]
    %vm162 = vcmp.ge.u32.totalorder %v161, 858993459
    %v163 = vmul.f32 %v159, 1.25
    %v164 = vsel %vm162, %v163, 0.0
    %v165 = vpack.c.bf16 %v164, %v164
    %v166 = vpack.c.bf16 %v46, %v45
    %v167 = vlaneseq
    %v168 = vshrl.u32 %v167, 7
    %v169 = vsub.s32 2, %v168
    %v170 = vrot.slane %v42, %v169
    %v172 = vsel %vm115, %v165, 0
    %174 = vmatprep.subr.bf16.mxu0 0
    %175 = vmatpush1.bf16.msra.mxu0 %v166
    %176 = vmatprep.subr.bf16.mxu0 0
    %177 = vmatpush1.bf16.msra.mxu0 0
    %178 = vmatprep.subr.bf16.mxu0 0
    %179 = vmatpush1.bf16.msra.mxu0 0
    %180 = vmatprep.subr.bf16.mxu0 0
    %181 = vmatpush1.bf16.msra.mxu0 0
    %182 = vmatprep.subr.bf16.mxu0 0
    %183 = vmatpush1.bf16.msra.mxu0 0
    %184 = vmatprep.subr.bf16.mxu0 0
    %185 = vmatpush1.bf16.msra.mxu0 0
    %186 = vmatprep.subr.bf16.mxu0 0
    %187 = vmatpush1.bf16.msra.mxu0 0
    %188 = vmatprep.subr.bf16.mxu0 0
    %189 = vmatpush1.bf16.msra.mxu0 0
    %190 = vmatprep.subr.bf16.mxu0 0
    %191 = vmatpush1.bf16.msra.mxu0 0
    %192 = vmatprep.subr.bf16.mxu0 0
    %193 = vmatpush1.bf16.msra.mxu0 0
    %194 = vmatprep.subr.bf16.mxu0 0
    %195 = vmatpush1.bf16.msra.mxu0 0
    %196 = vmatprep.subr.bf16.mxu0 0
    %197 = vmatpush1.bf16.msra.mxu0 0
    %198 = vmatprep.subr.bf16.mxu0 0
    %199 = vmatpush1.bf16.msra.mxu0 0
    %200 = vmatprep.subr.bf16.mxu0 0
    %201 = vmatpush1.bf16.msra.mxu0 0
    %202 = vmatprep.subr.bf16.mxu0 0
    %203 = vmatpush1.bf16.msra.mxu0 0
    %204 = vmatprep.subr.bf16.mxu0 0
    %205 = vmatpush1.bf16.msra.mxu0 0
    %206 = vmatprep.mubr.bf16.mxu0 0
    %207 = vmatmul.mubr.bf16.gmra.mrb[0].mxu0 %v172
    %v208 = vpop.f32.mrb[0].mxu0
    %v209 = vadd.f32 %v170, %v208
    %v210 = vpop.f32.mrb[0].mxu0
    %v211 = vpop.f32.mrb[0].mxu0
    %v212 = vpop.f32.mrb[0].mxu0
    %213 = vdwg.mxu0
    %v214 = vmax.f32 %v209, 0.0
    %s215 = scalar_lea.vmem [#allocation2], 16
    %v216 = vld [vmem:[%s215] sm:$0xff]
    %vm217 = vcmp.ge.u32.totalorder %v216, 858993459
    %v218 = vmul.f32 %v214, 1.25
    %v219 = vsel %vm217, %v218, 0.0
    %v220 = vpack.c.bf16 %v219, %v219
    %v221 = vpack.c.bf16 %v48, %v47
    %v222 = vlaneseq
    %v223 = vshrl.u32 %v222, 7
    %v224 = vsub.s32 3, %v223
    %v225 = vrot.slane %v42, %v224
    %v227 = vsel %vm115, %v220, 0
    %229 = vmatprep.subr.bf16.mxu0 0
    %230 = vmatpush1.bf16.msra.mxu0 %v221
    %231 = vmatprep.subr.bf16.mxu0 0
    %232 = vmatpush1.bf16.msra.mxu0 0
    %233 = vmatprep.subr.bf16.mxu0 0
    %234 = vmatpush1.bf16.msra.mxu0 0
    %235 = vmatprep.subr.bf16.mxu0 0
    %236 = vmatpush1.bf16.msra.mxu0 0
    %237 = vmatprep.subr.bf16.mxu0 0
    %238 = vmatpush1.bf16.msra.mxu0 0
    %239 = vmatprep.subr.bf16.mxu0 0
    %240 = vmatpush1.bf16.msra.mxu0 0
    %241 = vmatprep.subr.bf16.mxu0 0
    %242 = vmatpush1.bf16.msra.mxu0 0
    %243 = vmatprep.subr.bf16.mxu0 0
    %244 = vmatpush1.bf16.msra.mxu0 0
    %245 = vmatprep.subr.bf16.mxu0 0
    %246 = vmatpush1.bf16.msra.mxu0 0
    %247 = vmatprep.subr.bf16.mxu0 0
    %248 = vmatpush1.bf16.msra.mxu0 0
    %249 = vmatprep.subr.bf16.mxu0 0
    %250 = vmatpush1.bf16.msra.mxu0 0
    %251 = vmatprep.subr.bf16.mxu0 0
    %252 = vmatpush1.bf16.msra.mxu0 0
    %253 = vmatprep.subr.bf16.mxu0 0
    %254 = vmatpush1.bf16.msra.mxu0 0
    %255 = vmatprep.subr.bf16.mxu0 0
    %256 = vmatpush1.bf16.msra.mxu0 0
    %257 = vmatprep.subr.bf16.mxu0 0
    %258 = vmatpush1.bf16.msra.mxu0 0
    %259 = vmatprep.subr.bf16.mxu0 0
    %260 = vmatpush1.bf16.msra.mxu0 0
    %261 = vmatprep.mubr.bf16.mxu0 0
    %262 = vmatmul.mubr.bf16.gmra.mrb[0].mxu0 %v227
    %v263 = vpop.f32.mrb[0].mxu0
    %v264 = vadd.f32 %v225, %v263
    %v265 = vpop.f32.mrb[0].mxu0
    %v266 = vpop.f32.mrb[0].mxu0
    %v267 = vpop.f32.mrb[0].mxu0
    %268 = vdwg.mxu0
    %v269 = vmax.f32 %v264, 0.0
    %s270 = scalar_lea.vmem [#allocation2], 24
    %v271 = vld [vmem:[%s270] sm:$0xff]
    %vm272 = vcmp.ge.u32.totalorder %v271, 858993459
    %v273 = vmul.f32 %v269, 1.25
    %v274 = vsel %vm272, %v273, 0.0
    %v275 = vld [vmem:[%s4] sm:$0xff]
    %v276 = vld [vmem:[%s4 + $0x8] sm:$0xff]
    %v277 = vld [vmem:[%s6] sm:$0x1]
    %v278 = vpack.c.bf16 %v274, %v274
    %v279 = vpack.c.bf16 %v276, %v275
    %v281 = vlaneseq
    %v282 = vshrl.u32 %v281, 7
    %v283 = vsub.s32 0, %v282
    %v284 = vrot.slane %v277, %v283
    %v287 = vsel %vm115, %v278, 0
    %289 = vmatprep.subr.bf16.mxu0 0
    %290 = vmatpush1.bf16.msra.mxu0 %v279
    %291 = vmatprep.subr.bf16.mxu0 0
    %292 = vmatpush1.bf16.msra.mxu0 0
    %293 = vmatprep.subr.bf16.mxu0 0
    %294 = vmatpush1.bf16.msra.mxu0 0
    %295 = vmatprep.subr.bf16.mxu0 0
    %296 = vmatpush1.bf16.msra.mxu0 0
    %297 = vmatprep.subr.bf16.mxu0 0
    %298 = vmatpush1.bf16.msra.mxu0 0
    %299 = vmatprep.subr.bf16.mxu0 0
    %300 = vmatpush1.bf16.msra.mxu0 0
    %301 = vmatprep.subr.bf16.mxu0 0
    %302 = vmatpush1.bf16.msra.mxu0 0
    %303 = vmatprep.subr.bf16.mxu0 0
    %304 = vmatpush1.bf16.msra.mxu0 0
    %305 = vmatprep.subr.bf16.mxu0 0
    %306 = vmatpush1.bf16.msra.mxu0 0
    %307 = vmatprep.subr.bf16.mxu0 0
    %308 = vmatpush1.bf16.msra.mxu0 0
    %309 = vmatprep.subr.bf16.mxu0 0
    %310 = vmatpush1.bf16.msra.mxu0 0
    %311 = vmatprep.subr.bf16.mxu0 0
    %312 = vmatpush1.bf16.msra.mxu0 0
    %313 = vmatprep.subr.bf16.mxu0 0
    %314 = vmatpush1.bf16.msra.mxu0 0
    %315 = vmatprep.subr.bf16.mxu0 0
    %316 = vmatpush1.bf16.msra.mxu0 0
    %317 = vmatprep.subr.bf16.mxu0 0
    %318 = vmatpush1.bf16.msra.mxu0 0
    %319 = vmatprep.subr.bf16.mxu0 0
    %320 = vmatpush1.bf16.msra.mxu0 0
    %321 = vmatprep.mubr.bf16.mxu0 0
    %322 = vmatmul.mubr.bf16.gmra.mrb[0].mxu0 %v287
    %v323 = vpop.f32.mrb[0].mxu0
    %v324 = vadd.f32 %v284, %v323
    %v325 = vpop.f32.mrb[0].mxu0
    %v326 = vpop.f32.mrb[0].mxu0
    %v327 = vpop.f32.mrb[0].mxu0
    %328 = vdwg.mxu0
    %vm329 = vcmask 31744
    %330 = vst.msk [vmem:[%s7] sm:$0xff] %vm329, %v324
    // Predicated region
    $region34: #{tpu_custom_call.1} parent=1 // pred_check
      _
    $region35: #{tpu_custom_call.1} parent=1 // pred_check_branch
      %332 = sbr.rel (0) target = $region37
    $region36: #{tpu_custom_call.1} parent=1 // pred_region
      _
    $region37: #{tpu_custom_call.1} parent=1 // pred_fallthru
      _
    // Predicated region
    $region38: #{tpu_custom_call.1} parent=1 // pred_check
      _
    $region39: #{tpu_custom_call.1} parent=1 // pred_check_branch
      %334 = sbr.rel (0) target = $region41
    $region40: #{tpu_custom_call.1} parent=1 // pred_region
      _
    $region41: #{tpu_custom_call.1} parent=1 // pred_fallthru
      _
    %335 = vsyncpa [#allocation3], 1

</llo_original>
